<compile_context>
chip_gen: v7x
topology: tpu7x:2x2x1
jax: 0.10.0
libtpu: 0.0.40
codegen_flags: <defaults>
</compile_context>

<pallas_src>
import functools

import numpy as np
import jax
import jax.numpy as jnp
from jax.experimental import pallas as pl
from jax.experimental.pallas import tpu as pltpu


def _round_up(x, m):
    return (x + m - 1) // m * m


def _inner_loss_kernel(s_ref, t_ref, out_ref, *, temperature):
    """One grid step == a block of TB tasks.

    out_ref row layout (per task, lane-dense f32 row of width out_w):
      lane 0          : KL(softmax(t/T) || softmax(s/T)) * T   (batchmean)
      lane 1          : CE(student_logits, argmax(teacher))    (mean)
      lanes 2 .. N+1  : per-sample correctness flags (0.0 / 1.0)
    """
    s = s_ref[...].astype(jnp.float32)   # (TB, N, C)
    t = t_ref[...].astype(jnp.float32)   # (TB, N, C)
    tb, n, c = s.shape
    out_w = out_ref.shape[-1]
    inv_temp = 1.0 / temperature
    inv_n = 1.0 / n
    col = jax.lax.broadcasted_iota(jnp.int32, (tb, n, c), 2)

    # ---- shared row maxes (dedup: max(x/T) == max(x)/T) ----
    s_row_max = jnp.max(s, axis=-1, keepdims=True)        # (TB, N, 1)
    t_row_max = jnp.max(t, axis=-1, keepdims=True)        # (TB, N, 1)
    ds = s - s_row_max                                     # <= 0, shared residual
    dt = t - t_row_max

    # ---- teacher softmax numerator at temperature T (denominator factored) ----
    dt_T = dt * inv_temp
    t_exp = jnp.exp(dt_T)
    t_sum = jnp.sum(t_exp, axis=-1, keepdims=True)         # (TB, N, 1)
    log_tsum = jnp.log(t_sum)

    # ---- student log-sum-exp at T (KL path) and at 1 (CE path), shared ds ----
    ds_T = ds * inv_temp
    s_exp_T = jnp.exp(ds_T)
    s_lse_T = jnp.log(jnp.sum(s_exp_T, axis=-1, keepdims=True))

    # exp(ds) by repeated squaring/multiplying when T is a small integer
    # (saves one full-tile EUP exp; default temperature is 2.0).
    t_int = int(round(temperature))
    if abs(temperature - t_int) < 1e-12 and 1 <= t_int <= 4:
        s_exp_1 = s_exp_T
        for _ in range(t_int - 1):
            s_exp_1 = s_exp_1 * s_exp_T
    else:
        s_exp_1 = jnp.exp(ds)
    s_lse_1 = jnp.log(jnp.sum(s_exp_1, axis=-1, keepdims=True))   # (TB, N, 1)

    # ---- KL loss: batchmean * T (matches source module: T**1, not T**2) ----
    # per row: sum_c p*(log_p - log_q_T)
    #        = (1/t_sum) * sum_c t_exp*(dt_T - ds_T) + (s_lse_T - log_tsum)
    s1 = jnp.sum(t_exp * (dt_T - ds_T), axis=-1, keepdims=True)   # (TB, N, 1)
    row_kl = s1 * pl.reciprocal(t_sum, approx=False) + (s_lse_T - log_tsum)
    kl_task = jnp.sum(row_kl, axis=1) * (inv_n * temperature)     # (TB, 1)

    # ---- argmax (first occurrence, torch semantics) on UNscaled logits ----
    teacher_preds = jnp.min(jnp.where(t == t_row_max, col, c),
                            axis=-1, keepdims=True)               # (TB, N, 1)
    student_preds = jnp.min(jnp.where(s == s_row_max, col, c),
                            axis=-1, keepdims=True)               # (TB, N, 1)

    # ---- CE loss: F.cross_entropy(student, argmax(teacher)), log_q1 implicit ----
    onehot = col == teacher_preds
    picked = jnp.sum(jnp.where(onehot, ds, 0.0), axis=-1, keepdims=True) - s_lse_1
    ce_task = -jnp.sum(picked, axis=1) * inv_n                    # (TB, 1)

    # ---- per-sample correctness, scattered to lanes 2..N+1 of the output row ----
    match = (student_preds == teacher_preds).astype(jnp.float32)  # (TB, N, 1)
    lane3 = jax.lax.broadcasted_iota(jnp.int32, (1, n, out_w), 2)
    row3 = jax.lax.broadcasted_iota(jnp.int32, (1, n, out_w), 1)
    scatter = (lane3 == (row3 + 2)).astype(jnp.float32)           # (1, N, out_w)
    correct_row = jnp.sum(scatter * match, axis=1)                # (TB, out_w)

    # ---- assemble the lane-dense output row: kl @ lane0, ce @ lane1 ----
    lane2 = jax.lax.broadcasted_iota(jnp.int32, (tb, out_w), 1)
    out = jnp.where(lane2 == 0, kl_task, correct_row)
    out = jnp.where(lane2 == 1, ce_task, out)
    out_ref[...] = out


def inner_loss_pallas(student_logits, teacher_logits, temperature):
    """Batched inner-loss over a stack of tasks, one pallas_call.

    Args:
      student_logits, teacher_logits: float[T, N, C] (T tasks / inner steps).
        Any float dtype (e.g. bf16) is accepted; math is done in f32 in-kernel.
      temperature: python float.
    Returns:
      kl: f32[T], ce: f32[T], correct: int32[T, N].
    """
    assert student_logits.ndim == 3 and student_logits.shape == teacher_logits.shape
    n_tasks, n, c = student_logits.shape

    # Lane-dense output row width: kl, ce and N correctness flags, >= 128.
    out_w = max(128, _round_up(n + 2, 128))

    # Tasks-per-grid-step: multiple of 8 (output sublane constraint), capped so
    # double-buffered inputs + output stay far below scoped VMEM defaults.
    tb = min(128, _round_up(max(n_tasks, 1), 8))
    t_pad = _round_up(n_tasks, tb)
    if t_pad != n_tasks:
        pad = [(0, t_pad - n_tasks), (0, 0), (0, 0)]
        student_logits = jnp.pad(student_logits, pad)
        teacher_logits = jnp.pad(teacher_logits, pad)

    kernel = functools.partial(_inner_loss_kernel, temperature=float(temperature))

    out = pl.pallas_call(
        kernel,
        grid=(t_pad // tb,),
        in_specs=[
            pl.BlockSpec((tb, n, c), lambda i: (i, 0, 0)),
            pl.BlockSpec((tb, n, c), lambda i: (i, 0, 0)),
        ],
        out_specs=pl.BlockSpec((tb, out_w), lambda i: (i, 0)),
        out_shape=jax.ShapeDtypeStruct((t_pad, out_w), jnp.float32),
        compiler_params=pltpu.CompilerParams(
            # Each grid step writes its own output block -> the task axis may be
            # sharded across TensorCores (helps v7x, no-op on v5e/v6e).
            dimension_semantics=("parallel",),
        ),
    )(student_logits, teacher_logits)

    kl = out[:n_tasks, 0]
    ce = out[:n_tasks, 1]
    correct = out[:n_tasks, 2:2 + n].astype(jnp.int32)
    return kl, ce, correct


class FewShotClassifier:
    """Minimal JAX/Pallas counterpart of the PyTorch FewShotClassifier.

    The torch module registers no trainable parameters in __init__ (only loss
    hyper-parameters), so there are no weights to initialize here.
    """

    def __init__(self, seed=0, temperature=2.0, meta_loss='kl'):
        # set_torch_seed equivalent (deterministic, unused beyond seeding)
        self.rng = np.random.RandomState(seed=seed)
        _ = self.rng.randint(0, 999999)
        self.temperature = float(temperature)
        self.meta_loss = meta_loss
        self._fn = jax.jit(functools.partial(inner_loss_pallas,
                                             temperature=self.temperature))

    def inner_loss(self, student_logits, teacher_logits, return_nr_correct=False):
        """Single-task API, matching the torch signature ([N, C] logits)."""
        kl, ce, correct = self._fn(student_logits[None], teacher_logits[None])
        loss = kl[0] if self.meta_loss.lower() == 'kl' else ce[0]
        if return_nr_correct:
            return loss, correct[0]
        return loss

    def inner_loss_batch(self, student_logits, teacher_logits,
                         return_nr_correct=False):
        """Amortized API: [T, N, C] stacks of inner-loop evaluations -> one launch."""
        kl, ce, correct = self._fn(student_logits, teacher_logits)
        loss = kl if self.meta_loss.lower() == 'kl' else ce
        if return_nr_correct:
            return loss, correct
        return loss

    # TODO(synk): the MAML outer/inner loops, optimizer steps, transformer
    # forward (net_forward's fast_model), dataloader orchestration and
    # checkpoint I/O (forward / run_train_iter / finetune_* / save_model) are
    # host-side training logic with no kernel equivalent and are not
    # implemented here.


if __name__ == "__main__":
    key = jax.random.PRNGKey(0)
    k1, k2 = jax.random.split(key)
    T_TASKS, N, C = 4, 8, 32          # 4 tasks/steps, batch of 8, 32 classes
    TEMP = 2.0
    student = jax.random.normal(k1, (T_TASKS, N, C), dtype=jnp.float32)
    teacher = jax.random.normal(k2, (T_TASKS, N, C), dtype=jnp.float32)

    clf = FewShotClassifier(seed=0, temperature=TEMP, meta_loss='kl')

    # --- batched path: one pallas_call for all T_TASKS inner-loss evals ---
    fn = jax.jit(functools.partial(inner_loss_pallas, temperature=TEMP))
    kl, ce, correct = fn(student, teacher)
    jax.block_until_ready((kl, ce, correct))

    # --- plain-JAX reference (matches the torch semantics) ---
    log_q_T = jax.nn.log_softmax(student / TEMP, axis=-1)
    p_ref = jax.nn.softmax(teacher / TEMP, axis=-1)
    kl_ref = jnp.sum(p_ref * (jnp.log(p_ref) - log_q_T), axis=(1, 2)) / N * TEMP
    labels = jnp.argmax(teacher, axis=-1)                       # (T, N)
    log_q1 = jax.nn.log_softmax(student, axis=-1)
    picked = jnp.take_along_axis(log_q1, labels[..., None], axis=-1)[..., 0]
    ce_ref = -jnp.mean(picked, axis=-1)
    corr_ref = (jnp.argmax(student, -1) == labels).astype(jnp.int32)

    assert jnp.allclose(kl, kl_ref, atol=2e-5), (kl, kl_ref)
    assert jnp.allclose(ce, ce_ref, atol=2e-5), (ce, ce_ref)
    assert jnp.array_equal(correct, corr_ref)

    # --- amortized class API ---
    loss_b, correct_b = clf.inner_loss_batch(student, teacher,
                                             return_nr_correct=True)
    jax.block_until_ready((loss_b, correct_b))
    assert jnp.allclose(loss_b, kl_ref, atol=2e-5)
    assert jnp.array_equal(correct_b, corr_ref)

    # --- single-task class API (what the torch module's inner_loss does) ---
    loss, is_correct = clf.inner_loss(student[0], teacher[0],
                                      return_nr_correct=True)
    jax.block_until_ready((loss, is_correct))
    assert jnp.allclose(loss, kl_ref[0], atol=2e-5), (loss, kl_ref[0])
    assert jnp.array_equal(is_correct, corr_ref[0])

    print("KERNEL_OK")
</pallas_src>

<mosaic_0001>
module attributes {stable_mosaic.version = 11 : i64} {
  func.func @_inner_loss_kernel(%arg0: i32, %arg1: memref<8x8x32xf32, #tpu.memory_space<vmem>>, %arg2: memref<8x8x32xf32, #tpu.memory_space<vmem>>, %arg3: memref<8x128xf32, #tpu.memory_space<vmem>>) attributes {dimension_semantics = [#tpu.dimension_semantics<parallel>], iteration_bounds = array<i64: 1>, scalar_prefetch = 0 : i64, scratch_operands = 0 : i64, tpu.core_type = #tpu.core_type<tc>, window_params = [{transform_indices = @transform_0, window_bounds = array<i64: 8, 8, 32>}, {transform_indices = @transform_1, window_bounds = array<i64: 8, 8, 32>}, {transform_indices = @transform_2, window_bounds = array<i64: 8, 128>}]} {
    %c0 = arith.constant 0 : index
    %c0_0 = arith.constant 0 : index
    %c0_1 = arith.constant 0 : index
    %0 = vector.load %arg1[%c0, %c0_0, %c0_1] : memref<8x8x32xf32, #tpu.memory_space<vmem>>, vector<8x8x32xf32>
    %c0_2 = arith.constant 0 : index
    %c0_3 = arith.constant 0 : index
    %c0_4 = arith.constant 0 : index
    %1 = vector.load %arg2[%c0_2, %c0_3, %c0_4] : memref<8x8x32xf32, #tpu.memory_space<vmem>>, vector<8x8x32xf32>
    %2 = tpu.iota {dimensions = array<i32: 2>} : vector<8x8x32xi32>
    %cst = arith.constant dense<0xFF800000> : vector<8x8xf32>
    %3 = vector.multi_reduction <maximumf>, %0, %cst [2] : vector<8x8x32xf32> to vector<8x8xf32>
    %4 = vector.shape_cast %3 : vector<8x8xf32> to vector<8x8x1xf32>
    %cst_5 = arith.constant dense<0xFF800000> : vector<8x8xf32>
    %5 = vector.multi_reduction <maximumf>, %1, %cst_5 [2] : vector<8x8x32xf32> to vector<8x8xf32>
    %6 = vector.shape_cast %5 : vector<8x8xf32> to vector<8x8x1xf32>
    %7 = vector.broadcast %4 : vector<8x8x1xf32> to vector<8x8x32xf32>
    %8 = arith.subf %0, %7 : vector<8x8x32xf32>
    %9 = vector.broadcast %6 : vector<8x8x1xf32> to vector<8x8x32xf32>
    %10 = arith.subf %1, %9 : vector<8x8x32xf32>
    %cst_6 = arith.constant 5.000000e-01 : f32
    %11 = vector.broadcast %cst_6 : f32 to vector<8x8x32xf32>
    %12 = arith.mulf %10, %11 : vector<8x8x32xf32>
    %13 = math.exp %12 : vector<8x8x32xf32>
    %cst_7 = arith.constant dense<0.000000e+00> : vector<8x8xf32>
    %14 = vector.multi_reduction <add>, %13, %cst_7 [2] : vector<8x8x32xf32> to vector<8x8xf32>
    %15 = vector.shape_cast %14 : vector<8x8xf32> to vector<8x8x1xf32>
    %16 = math.log %15 : vector<8x8x1xf32>
    %cst_8 = arith.constant 5.000000e-01 : f32
    %17 = vector.broadcast %cst_8 : f32 to vector<8x8x32xf32>
    %18 = arith.mulf %8, %17 : vector<8x8x32xf32>
    %19 = math.exp %18 : vector<8x8x32xf32>
    %cst_9 = arith.constant dense<0.000000e+00> : vector<8x8xf32>
    %20 = vector.multi_reduction <add>, %19, %cst_9 [2] : vector<8x8x32xf32> to vector<8x8xf32>
    %21 = vector.shape_cast %20 : vector<8x8xf32> to vector<8x8x1xf32>
    %22 = math.log %21 : vector<8x8x1xf32>
    %23 = arith.mulf %19, %19 : vector<8x8x32xf32>
    %cst_10 = arith.constant dense<0.000000e+00> : vector<8x8xf32>
    %24 = vector.multi_reduction <add>, %23, %cst_10 [2] : vector<8x8x32xf32> to vector<8x8xf32>
    %25 = vector.shape_cast %24 : vector<8x8xf32> to vector<8x8x1xf32>
    %26 = math.log %25 : vector<8x8x1xf32>
    %27 = arith.subf %12, %18 : vector<8x8x32xf32>
    %28 = arith.mulf %13, %27 : vector<8x8x32xf32>
    %cst_11 = arith.constant dense<0.000000e+00> : vector<8x8xf32>
    %29 = vector.multi_reduction <add>, %28, %cst_11 [2] : vector<8x8x32xf32> to vector<8x8xf32>
    %30 = vector.shape_cast %29 : vector<8x8xf32> to vector<8x8x1xf32>
    %31 = tpu.reciprocal %15 : vector<8x8x1xf32> -> vector<8x8x1xf32>
    %32 = arith.mulf %30, %31 : vector<8x8x1xf32>
    %33 = arith.subf %22, %16 : vector<8x8x1xf32>
    %34 = arith.addf %32, %33 : vector<8x8x1xf32>
    %cst_12 = arith.constant dense<0.000000e+00> : vector<8x1xf32>
    %35 = vector.multi_reduction <add>, %34, %cst_12 [1] : vector<8x8x1xf32> to vector<8x1xf32>
    %cst_13 = arith.constant 2.500000e-01 : f32
    %36 = vector.broadcast %cst_13 : f32 to vector<8x1xf32>
    %37 = arith.mulf %35, %36 : vector<8x1xf32>
    %38 = vector.broadcast %6 : vector<8x8x1xf32> to vector<8x8x32xf32>
    %39 = arith.cmpf oeq, %1, %38 : vector<8x8x32xf32>
    %c32_i32 = arith.constant 32 : i32
    %40 = vector.broadcast %c32_i32 : i32 to vector<8x8x32xi32>
    %41 = arith.select %39, %2, %40 : vector<8x8x32xi1>, vector<8x8x32xi32>
    %cst_14 = arith.constant dense<2147483647> : vector<8x8xi32>
    %42 = vector.multi_reduction <minsi>, %41, %cst_14 [2] : vector<8x8x32xi32> to vector<8x8xi32>
    %43 = vector.shape_cast %42 : vector<8x8xi32> to vector<8x8x1xi32>
    %44 = vector.broadcast %4 : vector<8x8x1xf32> to vector<8x8x32xf32>
    %45 = arith.cmpf oeq, %0, %44 : vector<8x8x32xf32>
    %c32_i32_15 = arith.constant 32 : i32
    %46 = vector.broadcast %c32_i32_15 : i32 to vector<8x8x32xi32>
    %47 = arith.select %45, %2, %46 : vector<8x8x32xi1>, vector<8x8x32xi32>
    %cst_16 = arith.constant dense<2147483647> : vector<8x8xi32>
    %48 = vector.multi_reduction <minsi>, %47, %cst_16 [2] : vector<8x8x32xi32> to vector<8x8xi32>
    %49 = vector.shape_cast %48 : vector<8x8xi32> to vector<8x8x1xi32>
    %50 = vector.broadcast %43 : vector<8x8x1xi32> to vector<8x8x32xi32>
    %51 = arith.cmpi eq, %2, %50 : vector<8x8x32xi32>
    %cst_17 = arith.constant 0.000000e+00 : f32
    %52 = vector.broadcast %cst_17 : f32 to vector<8x8x32xf32>
    %53 = arith.select %51, %8, %52 : vector<8x8x32xi1>, vector<8x8x32xf32>
    %cst_18 = arith.constant dense<0.000000e+00> : vector<8x8xf32>
    %54 = vector.multi_reduction <add>, %53, %cst_18 [2] : vector<8x8x32xf32> to vector<8x8xf32>
    %55 = vector.shape_cast %54 : vector<8x8xf32> to vector<8x8x1xf32>
    %56 = arith.subf %55, %26 : vector<8x8x1xf32>
    %cst_19 = arith.constant dense<0.000000e+00> : vector<8x1xf32>
    %57 = vector.multi_reduction <add>, %56, %cst_19 [1] : vector<8x8x1xf32> to vector<8x1xf32>
    %cst_20 = arith.constant 0.000000e+00 : f32
    %58 = vector.broadcast %cst_20 : f32 to vector<8x1xf32>
    %59 = arith.subf %58, %57 : vector<8x1xf32>
    %cst_21 = arith.constant 1.250000e-01 : f32
    %60 = vector.broadcast %cst_21 : f32 to vector<8x1xf32>
    %61 = arith.mulf %59, %60 : vector<8x1xf32>
    %62 = arith.cmpi eq, %49, %43 : vector<8x8x1xi32>
    %63 = arith.extui %62 : vector<8x8x1xi1> to vector<8x8x1xi32>
    %64 = arith.sitofp %63 : vector<8x8x1xi32> to vector<8x8x1xf32>
    %65 = tpu.iota {dimensions = array<i32: 2>} : vector<1x8x128xi32>
    %66 = tpu.iota {dimensions = array<i32: 1>} : vector<1x8x128xi32>
    %c2_i32 = arith.constant 2 : i32
    %67 = vector.broadcast %c2_i32 : i32 to vector<1x8x128xi32>
    %68 = arith.addi %66, %67 : vector<1x8x128xi32>
    %69 = arith.cmpi eq, %65, %68 : vector<1x8x128xi32>
    %70 = arith.extui %69 : vector<1x8x128xi1> to vector<1x8x128xi32>
    %71 = arith.sitofp %70 : vector<1x8x128xi32> to vector<1x8x128xf32>
    %72 = vector.broadcast %71 : vector<1x8x128xf32> to vector<8x8x128xf32>
    %73 = vector.broadcast %64 : vector<8x8x1xf32> to vector<8x8x128xf32>
    %74 = arith.mulf %72, %73 : vector<8x8x128xf32>
    %cst_22 = arith.constant dense<0.000000e+00> : vector<8x128xf32>
    %75 = vector.multi_reduction <add>, %74, %cst_22 [1] : vector<8x8x128xf32> to vector<8x128xf32>
    %76 = tpu.iota {dimensions = array<i32: 1>} : vector<8x128xi32>
    %c0_i32 = arith.constant 0 : i32
    %77 = vector.broadcast %c0_i32 : i32 to vector<8x128xi32>
    %78 = arith.cmpi eq, %76, %77 : vector<8x128xi32>
    %79 = vector.shape_cast %37 : vector<8x1xf32> to vector<8x1xf32>
    %80 = vector.broadcast %79 : vector<8x1xf32> to vector<8x128xf32>
    %81 = arith.select %78, %80, %75 : vector<8x128xi1>, vector<8x128xf32>
    %c1_i32 = arith.constant 1 : i32
    %82 = vector.broadcast %c1_i32 : i32 to vector<8x128xi32>
    %83 = arith.cmpi eq, %76, %82 : vector<8x128xi32>
    %84 = vector.shape_cast %61 : vector<8x1xf32> to vector<8x1xf32>
    %85 = vector.broadcast %84 : vector<8x1xf32> to vector<8x128xf32>
    %86 = arith.select %83, %85, %81 : vector<8x128xi1>, vector<8x128xf32>
    %c0_23 = arith.constant 0 : index
    %c0_24 = arith.constant 0 : index
    %87 = vector.load %arg3[%c0_23, %c0_24] : memref<8x128xf32, #tpu.memory_space<vmem>>, vector<8x128xf32>
    tpu.vector_store %arg3[%c0_23, %c0_24], %86 {strides = array<i32>} : memref<8x128xf32, #tpu.memory_space<vmem>>, vector<8x128xf32>,
    return
  }
  func.func @transform_0(%arg0: i32) -> (i32, i32, i32) {
    %c0_i32 = arith.constant 0 : i32
    %c0_i32_0 = arith.constant 0 : i32
    %c0_i32_1 = arith.constant 0 : i32
    return %arg0, %c0_i32, %c0_i32_0 : i32, i32, i32
  }
  func.func @transform_1(%arg0: i32) -> (i32, i32, i32) {
    %c0_i32 = arith.constant 0 : i32
    %c0_i32_0 = arith.constant 0 : i32
    %c0_i32_1 = arith.constant 0 : i32
    return %arg0, %c0_i32, %c0_i32_0 : i32, i32, i32
  }
  func.func @transform_2(%arg0: i32) -> (i32, i32) {
    %c0_i32 = arith.constant 0 : i32
    %c0_i32_0 = arith.constant 0 : i32
    return %arg0, %c0_i32 : i32, i32
  }
}

</mosaic_0001>

<llo_original>
// kernel: inner_loss_pallas.1
$region0: #{inner_loss_pallas.1}
  #allocation0 [shape = 'u32[]', space=smem, size = 0x4, offset = 0x4, fixed_abs, tag = 'smem constant byte address 0x4 - core index']
  #allocation1 [shape = 'u32[144,128]{1,0:T(1,128)}', space=vmem, size = 0x12000, scoped, tag = 'internal scratch']
  %s0 = inlined_call_operand.vmem [shape: f32[8,8,32], index: 0, kind: input, shape index: {}]
  %s1 = inlined_call_operand.vmem [shape: f32[8,8,32], index: 1, kind: input, shape index: {}]
  %s2 = inlined_call_operand.vmem [shape: f32[8,128], index: 2, kind: output, shape index: {}]
  %s3 = sld [smem:[#allocation0]]
  $region18: #{inner_loss_pallas.1} parent=0
    _
  %s5 = ssub.s32 1, %s3
  %s6 = scalar_select 0, %s5, %s3
  // Predicated region
  $region2: #{inner_loss_pallas.1} parent=0 // pred_check
    _
  $region3: #{inner_loss_pallas.1} parent=0 // pred_check_branch
    %8 = sbr.rel (0) target = $region5
  $region4: #{inner_loss_pallas.1} parent=0 // pred_region
    _
  $region5: #{inner_loss_pallas.1} parent=0 // pred_fallthru
    _
  // Predicated region
  $region6: #{inner_loss_pallas.1} parent=0 // pred_check
    _
  $region7: #{inner_loss_pallas.1} parent=0 // pred_check_branch
    %10 = sbr.rel (0) target = $region9
  $region8: #{inner_loss_pallas.1} parent=0 // pred_region
    _
  $region9: #{inner_loss_pallas.1} parent=0 // pred_fallthru
    _
  %v11 = vld [vmem:[%s0] sm:$0xff]
  %v12 = vld [vmem:[%s0 + $0x8] sm:$0xff]
  %v13 = vld [vmem:[%s0 + $0x10] sm:$0xff]
  %v14 = vld [vmem:[%s0 + $0x18] sm:$0xff]
  %v15 = vld [vmem:[%s0 + $0x20] sm:$0xff]
  %v16 = vld [vmem:[%s0 + $0x28] sm:$0xff]
  %v17 = vld [vmem:[%s0 + $0x30] sm:$0xff]
  %v18 = vld [vmem:[%s0 + $0x38] sm:$0xff]
  %v19 = vld [vmem:[%s1] sm:$0xff]
  %v20 = vld [vmem:[%s1 + $0x8] sm:$0xff]
  %v21 = vld [vmem:[%s1 + $0x10] sm:$0xff]
  %v22 = vld [vmem:[%s1 + $0x18] sm:$0xff]
  %v23 = vld [vmem:[%s1 + $0x20] sm:$0xff]
  %v24 = vld [vmem:[%s1 + $0x28] sm:$0xff]
  %v25 = vld [vmem:[%s1 + $0x30] sm:$0xff]
  %v26 = vld [vmem:[%s1 + $0x38] sm:$0xff]
  %v27 = vlaneseq
  %v28 = vand.u32 %v27, 127
  %vm29 = vcmask 261120
  %v30 = vsel %vm29, %v11, -inf
  %31 = vmax.xlane.f32.xlu0 %v30
  %v32 = vpop.xlane.xlu0 %31
  %v33 = vsel %vm29, %v12, -inf
  %34 = vmax.xlane.f32.xlu0 %v33
  %v35 = vpop.xlane.xlu0 %34
  %v36 = vsel %vm29, %v13, -inf
  %37 = vmax.xlane.f32.xlu0 %v36
  %v38 = vpop.xlane.xlu0 %37
  %v39 = vsel %vm29, %v14, -inf
  %40 = vmax.xlane.f32.xlu0 %v39
  %v41 = vpop.xlane.xlu0 %40
  %v42 = vsel %vm29, %v15, -inf
  %43 = vmax.xlane.f32.xlu0 %v42
  %v44 = vpop.xlane.xlu0 %43
  %v45 = vsel %vm29, %v16, -inf
  %46 = vmax.xlane.f32.xlu0 %v45
  %v47 = vpop.xlane.xlu0 %46
  %v48 = vsel %vm29, %v17, -inf
  %49 = vmax.xlane.f32.xlu0 %v48
  %v50 = vpop.xlane.xlu0 %49
  %v51 = vsel %vm29, %v18, -inf
  %52 = vmax.xlane.f32.xlu0 %v51
  %v53 = vpop.xlane.xlu0 %52
  %v54 = vsel %vm29, %v19, -inf
  %55 = vmax.xlane.f32.xlu0 %v54
  %v56 = vpop.xlane.xlu0 %55
  %v57 = vsel %vm29, %v20, -inf
  %58 = vmax.xlane.f32.xlu0 %v57
  %v59 = vpop.xlane.xlu0 %58
  %v60 = vsel %vm29, %v21, -inf
  %61 = vmax.xlane.f32.xlu0 %v60
  %v62 = vpop.xlane.xlu0 %61
  %v63 = vsel %vm29, %v22, -inf
  %64 = vmax.xlane.f32.xlu0 %v63
  %v65 = vpop.xlane.xlu0 %64
  %v66 = vsel %vm29, %v23, -inf
  %67 = vmax.xlane.f32.xlu0 %v66
  %v68 = vpop.xlane.xlu0 %67
  %v69 = vsel %vm29, %v24, -inf
  %70 = vmax.xlane.f32.xlu0 %v69
  %v71 = vpop.xlane.xlu0 %70
  %v72 = vsel %vm29, %v25, -inf
  %73 = vmax.xlane.f32.xlu0 %v72
  %v74 = vpop.xlane.xlu0 %73
  %v75 = vsel %vm29, %v26, -inf
  %76 = vmax.xlane.f32.xlu0 %v75
  %v77 = vpop.xlane.xlu0 %76
  %v78 = vsub.f32 %v11, %v32
  %v79 = vsub.f32 %v12, %v35
  %v80 = vsub.f32 %v13, %v38
  %v81 = vsub.f32 %v14, %v41
  %v82 = vsub.f32 %v15, %v44
  %v83 = vsub.f32 %v16, %v47
  %v84 = vsub.f32 %v17, %v50
  %v85 = vsub.f32 %v18, %v53
  %v86 = vsub.f32 %v19, %v56
  %v87 = vsub.f32 %v20, %v59
  %v88 = vsub.f32 %v21, %v62
  %v89 = vsub.f32 %v22, %v65
  %v90 = vsub.f32 %v23, %v68
  %v91 = vsub.f32 %v24, %v71
  %v92 = vsub.f32 %v25, %v74
  %v93 = vsub.f32 %v26, %v77
  %v94 = vmul.f32 %v86, 0.5
  %v95 = vmul.f32 %v87, 0.5
  %v96 = vmul.f32 %v88, 0.5
  %v97 = vmul.f32 %v89, 0.5
  %v98 = vmul.f32 %v90, 0.5
  %v99 = vmul.f32 %v91, 0.5
  %v100 = vmul.f32 %v92, 0.5
  %v101 = vmul.f32 %v93, 0.5
  %v102 = vmul.f32 %v94, 1.442695
  %v103 = vpow.pop %v102
  %v104 = vmul.f32 %v95, 1.442695
  %v105 = vpow.pop %v104
  %v106 = vmul.f32 %v96, 1.442695
  %v107 = vpow.pop %v106
  %v108 = vmul.f32 %v97, 1.442695
  %v109 = vpow.pop %v108
  %v110 = vmul.f32 %v98, 1.442695
  %v111 = vpow.pop %v110
  %v112 = vmul.f32 %v99, 1.442695
  %v113 = vpow.pop %v112
  %v114 = vmul.f32 %v100, 1.442695
  %v115 = vpow.pop %v114
  %v116 = vmul.f32 %v101, 1.442695
  %v117 = vpow.pop %v116
  %v118 = vsel %vm29, %v103, 0.0
  %119 = vadd.xlane.f32.xlu0 %v118
  %v120 = vpop.xlane.xlu0 %119
  %v121 = vsel %vm29, %v105, 0.0
  %122 = vadd.xlane.f32.xlu0 %v121
  %v123 = vpop.xlane.xlu0 %122
  %v124 = vsel %vm29, %v107, 0.0
  %125 = vadd.xlane.f32.xlu0 %v124
  %v126 = vpop.xlane.xlu0 %125
  %v127 = vsel %vm29, %v109, 0.0
  %128 = vadd.xlane.f32.xlu0 %v127
  %v129 = vpop.xlane.xlu0 %128
  %v130 = vsel %vm29, %v111, 0.0
  %131 = vadd.xlane.f32.xlu0 %v130
  %v132 = vpop.xlane.xlu0 %131
  %v133 = vsel %vm29, %v113, 0.0
  %134 = vadd.xlane.f32.xlu0 %v133
  %v135 = vpop.xlane.xlu0 %134
  %v136 = vsel %vm29, %v115, 0.0
  %137 = vadd.xlane.f32.xlu0 %v136
  %v138 = vpop.xlane.xlu0 %137
  %v139 = vsel %vm29, %v117, 0.0
  %140 = vadd.xlane.f32.xlu0 %v139
  %v141 = vpop.xlane.xlu0 %140
  %v142 = vlog2.pop %v120
  %v143 = vmul.f32 %v142, 0.6931472
  %v144 = vlog2.pop %v123
  %v145 = vmul.f32 %v144, 0.6931472
  %v146 = vlog2.pop %v126
  %v147 = vmul.f32 %v146, 0.6931472
  %v148 = vlog2.pop %v129
  %v149 = vmul.f32 %v148, 0.6931472
  %v150 = vlog2.pop %v132
  %v151 = vmul.f32 %v150, 0.6931472
  %v152 = vlog2.pop %v135
  %v153 = vmul.f32 %v152, 0.6931472
  %v154 = vlog2.pop %v138
  %v155 = vmul.f32 %v154, 0.6931472
  %v156 = vlog2.pop %v141
  %v157 = vmul.f32 %v156, 0.6931472
  %v158 = vmul.f32 %v78, 0.5
  %v159 = vmul.f32 %v79, 0.5
  %v160 = vmul.f32 %v80, 0.5
  %v161 = vmul.f32 %v81, 0.5
  %v162 = vmul.f32 %v82, 0.5
  %v163 = vmul.f32 %v83, 0.5
  %v164 = vmul.f32 %v84, 0.5
  %v165 = vmul.f32 %v85, 0.5
  %v166 = vmul.f32 %v158, 1.442695
  %v167 = vpow.pop %v166
  %v168 = vmul.f32 %v159, 1.442695
  %v169 = vpow.pop %v168
  %v170 = vmul.f32 %v160, 1.442695
  %v171 = vpow.pop %v170
  %v172 = vmul.f32 %v161, 1.442695
  %v173 = vpow.pop %v172
  %v174 = vmul.f32 %v162, 1.442695
  %v175 = vpow.pop %v174
  %v176 = vmul.f32 %v163, 1.442695
  %v177 = vpow.pop %v176
  %v178 = vmul.f32 %v164, 1.442695
  %v179 = vpow.pop %v178
  %v180 = vmul.f32 %v165, 1.442695
  %v181 = vpow.pop %v180
  %v182 = vsel %vm29, %v167, 0.0
  %183 = vadd.xlane.f32.xlu0 %v182
  %v184 = vpop.xlane.xlu0 %183
  %v185 = vsel %vm29, %v169, 0.0
  %186 = vadd.xlane.f32.xlu0 %v185
  %v187 = vpop.xlane.xlu0 %186
  %v188 = vsel %vm29, %v171, 0.0
  %189 = vadd.xlane.f32.xlu0 %v188
  %v190 = vpop.xlane.xlu0 %189
  %v191 = vsel %vm29, %v173, 0.0
  %192 = vadd.xlane.f32.xlu0 %v191
  %v193 = vpop.xlane.xlu0 %192
  %v194 = vsel %vm29, %v175, 0.0
  %195 = vadd.xlane.f32.xlu0 %v194
  %v196 = vpop.xlane.xlu0 %195
  %v197 = vsel %vm29, %v177, 0.0
  %198 = vadd.xlane.f32.xlu0 %v197
  %v199 = vpop.xlane.xlu0 %198
  %v200 = vsel %vm29, %v179, 0.0
  %201 = vadd.xlane.f32.xlu0 %v200
  %v202 = vpop.xlane.xlu0 %201
  %v203 = vsel %vm29, %v181, 0.0
  %204 = vadd.xlane.f32.xlu0 %v203
  %v205 = vpop.xlane.xlu0 %204
  %v206 = vlog2.pop %v184
  %v207 = vmul.f32 %v206, 0.6931472
  %v208 = vlog2.pop %v187
  %v209 = vmul.f32 %v208, 0.6931472
  %v210 = vlog2.pop %v190
  %v211 = vmul.f32 %v210, 0.6931472
  %v212 = vlog2.pop %v193
  %v213 = vmul.f32 %v212, 0.6931472
  %v214 = vlog2.pop %v196
  %v215 = vmul.f32 %v214, 0.6931472
  %v216 = vlog2.pop %v199
  %v217 = vmul.f32 %v216, 0.6931472
  %v218 = vlog2.pop %v202
  %v219 = vmul.f32 %v218, 0.6931472
  %v220 = vlog2.pop %v205
  %v221 = vmul.f32 %v220, 0.6931472
  %v222 = vmul.f32 %v167, %v167
  %v223 = vmul.f32 %v169, %v169
  %v224 = vmul.f32 %v171, %v171
  %v225 = vmul.f32 %v173, %v173
  %v226 = vmul.f32 %v175, %v175
  %v227 = vmul.f32 %v177, %v177
  %v228 = vmul.f32 %v179, %v179
  %v229 = vmul.f32 %v181, %v181
  %v230 = vsel %vm29, %v222, 0.0
  %231 = vadd.xlane.f32.xlu0 %v230
  %v232 = vpop.xlane.xlu0 %231
  %v233 = vsel %vm29, %v223, 0.0
  %234 = vadd.xlane.f32.xlu0 %v233
  %v235 = vpop.xlane.xlu0 %234
  %v236 = vsel %vm29, %v224, 0.0
  %237 = vadd.xlane.f32.xlu0 %v236
  %v238 = vpop.xlane.xlu0 %237
  %v239 = vsel %vm29, %v225, 0.0
  %240 = vadd.xlane.f32.xlu0 %v239
  %v241 = vpop.xlane.xlu0 %240
  %v242 = vsel %vm29, %v226, 0.0
  %243 = vadd.xlane.f32.xlu0 %v242
  %v244 = vpop.xlane.xlu0 %243
  %v245 = vsel %vm29, %v227, 0.0
  %246 = vadd.xlane.f32.xlu0 %v245
  %v247 = vpop.xlane.xlu0 %246
  %v248 = vsel %vm29, %v228, 0.0
  %249 = vadd.xlane.f32.xlu0 %v248
  %v250 = vpop.xlane.xlu0 %249
  %v251 = vsel %vm29, %v229, 0.0
  %252 = vadd.xlane.f32.xlu0 %v251
  %v253 = vpop.xlane.xlu0 %252
  %v254 = vlog2.pop %v232
  %v255 = vmul.f32 %v254, 0.6931472
  %v256 = vlog2.pop %v235
  %v257 = vmul.f32 %v256, 0.6931472
  %v258 = vlog2.pop %v238
  %v259 = vmul.f32 %v258, 0.6931472
  %v260 = vlog2.pop %v241
  %v261 = vmul.f32 %v260, 0.6931472
  %v262 = vlog2.pop %v244
  %v263 = vmul.f32 %v262, 0.6931472
  %v264 = vlog2.pop %v247
  %v265 = vmul.f32 %v264, 0.6931472
  %v266 = vlog2.pop %v250
  %v267 = vmul.f32 %v266, 0.6931472
  %v268 = vlog2.pop %v253
  %v269 = vmul.f32 %v268, 0.6931472
  %v270 = vsub.f32 %v94, %v158
  %v271 = vsub.f32 %v95, %v159
  %v272 = vsub.f32 %v96, %v160
  %v273 = vsub.f32 %v97, %v161
  %v274 = vsub.f32 %v98, %v162
  %v275 = vsub.f32 %v99, %v163
  %v276 = vsub.f32 %v100, %v164
  %v277 = vsub.f32 %v101, %v165
  %v278 = vmul.f32 %v103, %v270
  %v279 = vmul.f32 %v105, %v271
  %v280 = vmul.f32 %v107, %v272
  %v281 = vmul.f32 %v109, %v273
  %v282 = vmul.f32 %v111, %v274
  %v283 = vmul.f32 %v113, %v275
  %v284 = vmul.f32 %v115, %v276
  %v285 = vmul.f32 %v117, %v277
  %v286 = vsel %vm29, %v278, 0.0
  %287 = vadd.xlane.f32.xlu0 %v286
  %v288 = vpop.xlane.xlu0 %287
  %v289 = vsel %vm29, %v279, 0.0
  %290 = vadd.xlane.f32.xlu0 %v289
  %v291 = vpop.xlane.xlu0 %290
  %v292 = vsel %vm29, %v280, 0.0
  %293 = vadd.xlane.f32.xlu0 %v292
  %v294 = vpop.xlane.xlu0 %293
  %v295 = vsel %vm29, %v281, 0.0
  %296 = vadd.xlane.f32.xlu0 %v295
  %v297 = vpop.xlane.xlu0 %296
  %v298 = vsel %vm29, %v282, 0.0
  %299 = vadd.xlane.f32.xlu0 %v298
  %v300 = vpop.xlane.xlu0 %299
  %v301 = vsel %vm29, %v283, 0.0
  %302 = vadd.xlane.f32.xlu0 %v301
  %v303 = vpop.xlane.xlu0 %302
  %v304 = vsel %vm29, %v284, 0.0
  %305 = vadd.xlane.f32.xlu0 %v304
  %v306 = vpop.xlane.xlu0 %305
  %v307 = vsel %vm29, %v285, 0.0
  %308 = vadd.xlane.f32.xlu0 %v307
  %v309 = vpop.xlane.xlu0 %308
  %v310 = vrcp.pop %v120
  %v311 = vrcp.pop %v123
  %v312 = vrcp.pop %v126
  %v313 = vrcp.pop %v129
  %v314 = vrcp.pop %v132
  %v315 = vrcp.pop %v135
  %v316 = vrcp.pop %v138
  %v317 = vrcp.pop %v141
  %v318 = vmul.f32 %v288, %v310
  %v319 = vmul.f32 %v291, %v311
  %v320 = vmul.f32 %v294, %v312
  %v321 = vmul.f32 %v297, %v313
  %v322 = vmul.f32 %v300, %v314
  %v323 = vmul.f32 %v303, %v315
  %v324 = vmul.f32 %v306, %v316
  %v325 = vmul.f32 %v309, %v317
  %v326 = vsub.f32 %v207, %v143
  %v327 = vsub.f32 %v209, %v145
  %v328 = vsub.f32 %v211, %v147
  %v329 = vsub.f32 %v213, %v149
  %v330 = vsub.f32 %v215, %v151
  %v331 = vsub.f32 %v217, %v153
  %v332 = vsub.f32 %v219, %v155
  %v333 = vsub.f32 %v221, %v157
  %v334 = vadd.f32 %v318, %v326
  %v335 = vadd.f32 %v319, %v327
  %v336 = vadd.f32 %v320, %v328
  %v337 = vadd.f32 %v321, %v329
  %v338 = vadd.f32 %v322, %v330
  %v339 = vadd.f32 %v323, %v331
  %v340 = vadd.f32 %v324, %v332
  %v341 = vadd.f32 %v325, %v333
  %v342 = vrot.slane %v334, 4
  %v343 = vadd.f32 %v334, %v342
  %v344 = vrot.slane %v343, 2
  %v345 = vadd.f32 %v343, %v344
  %v346 = vrot.slane %v345, 1
  %v347 = vadd.f32 %v345, %v346
  %v348 = vrot.slane %v335, 4
  %v349 = vadd.f32 %v335, %v348
  %v350 = vrot.slane %v349, 2
  %v351 = vadd.f32 %v349, %v350
  %v352 = vrot.slane %v351, 1
  %v353 = vadd.f32 %v351, %v352
  %v354 = vrot.slane %v336, 4
  %v355 = vadd.f32 %v336, %v354
  %v356 = vrot.slane %v355, 2
  %v357 = vadd.f32 %v355, %v356
  %v358 = vrot.slane %v357, 1
  %v359 = vadd.f32 %v357, %v358
  %v360 = vrot.slane %v337, 4
  %v361 = vadd.f32 %v337, %v360
  %v362 = vrot.slane %v361, 2
  %v363 = vadd.f32 %v361, %v362
  %v364 = vrot.slane %v363, 1
  %v365 = vadd.f32 %v363, %v364
  %v366 = vrot.slane %v338, 4
  %v367 = vadd.f32 %v338, %v366
  %v368 = vrot.slane %v367, 2
  %v369 = vadd.f32 %v367, %v368
  %v370 = vrot.slane %v369, 1
  %v371 = vadd.f32 %v369, %v370
  %v372 = vrot.slane %v339, 4
  %v373 = vadd.f32 %v339, %v372
  %v374 = vrot.slane %v373, 2
  %v375 = vadd.f32 %v373, %v374
  %v376 = vrot.slane %v375, 1
  %v377 = vadd.f32 %v375, %v376
  %v378 = vrot.slane %v340, 4
  %v379 = vadd.f32 %v340, %v378
  %v380 = vrot.slane %v379, 2
  %v381 = vadd.f32 %v379, %v380
  %v382 = vrot.slane %v381, 1
  %v383 = vadd.f32 %v381, %v382
  %v384 = vrot.slane %v341, 4
  %v385 = vadd.f32 %v341, %v384
  %v386 = vrot.slane %v385, 2
  %v387 = vadd.f32 %v385, %v386
  %v388 = vrot.slane %v387, 1
  %v389 = vadd.f32 %v387, %v388
  %v390 = vmul.f32 %v347, 0.25
  %v391 = vmul.f32 %v353, 0.25
  %v392 = vmul.f32 %v359, 0.25
  %v393 = vmul.f32 %v365, 0.25
  %v394 = vmul.f32 %v371, 0.25
  %v395 = vmul.f32 %v377, 0.25
  %v396 = vmul.f32 %v383, 0.25
  %v397 = vmul.f32 %v389, 0.25
  %vm398 = vcmp.eq.f32.partialorder %v19, %v56
  %vm399 = vcmp.eq.f32.partialorder %v20, %v59
  %vm400 = vcmp.eq.f32.partialorder %v21, %v62
  %vm401 = vcmp.eq.f32.partialorder %v22, %v65
  %vm402 = vcmp.eq.f32.partialorder %v23, %v68
  %vm403 = vcmp.eq.f32.partialorder %v24, %v71
  %vm404 = vcmp.eq.f32.partialorder %v25, %v74
  %vm405 = vcmp.eq.f32.partialorder %v26, %v77
  %v406 = vsel %vm398, %v28, 32
  %v407 = vsel %vm399, %v28, 32
  %v408 = vsel %vm400, %v28, 32
  %v409 = vsel %vm401, %v28, 32
  %v410 = vsel %vm402, %v28, 32
  %v411 = vsel %vm403, %v28, 32
  %v412 = vsel %vm404, %v28, 32
  %v413 = vsel %vm405, %v28, 32
  %v414 = vsel %vm29, %v406, 2147483647
  %v415 = vand.u32 %v414, 65535
  %v416 = vshra.s32 %v414, 16
  %v417 = vcvt.s32.f32 %v415
  %v418 = vcvt.s32.f32 %v416
  %419 = vmin.xlane.f32.xlu0 %v418
  %v420 = vpop.xlane.xlu0 %419
  %vm421 = vcmp.eq.f32.partialorder %v418, %v420
  %v422 = vsel %vm421, %v417, inf
  %423 = vmin.xlane.f32.xlu0 %v422
  %v424 = vpop.xlane.xlu0 %423
  %v425 = vcvt.f32.s32 %v424
  %v426 = vcvt.f32.s32 %v420
  %v427 = vshll.u32 %v426, 16
  %v428 = vadd.s32 %v427, %v425
  %v429 = vsel %vm29, %v407, 2147483647
  %v430 = vand.u32 %v429, 65535
  %v431 = vshra.s32 %v429, 16
  %v432 = vcvt.s32.f32 %v430
  %v433 = vcvt.s32.f32 %v431
  %434 = vmin.xlane.f32.xlu0 %v433
  %v435 = vpop.xlane.xlu0 %434
  %vm436 = vcmp.eq.f32.partialorder %v433, %v435
  %v437 = vsel %vm436, %v432, inf
  %438 = vmin.xlane.f32.xlu0 %v437
  %v439 = vpop.xlane.xlu0 %438
  %v440 = vcvt.f32.s32 %v439
  %v441 = vcvt.f32.s32 %v435
  %v442 = vshll.u32 %v441, 16
  %v443 = vadd.s32 %v442, %v440
  %v444 = vsel %vm29, %v408, 2147483647
  %v445 = vand.u32 %v444, 65535
  %v446 = vshra.s32 %v444, 16
  %v447 = vcvt.s32.f32 %v445
  %v448 = vcvt.s32.f32 %v446
  %449 = vmin.xlane.f32.xlu0 %v448
  %v450 = vpop.xlane.xlu0 %449
  %vm451 = vcmp.eq.f32.partialorder %v448, %v450
  %v452 = vsel %vm451, %v447, inf
  %453 = vmin.xlane.f32.xlu0 %v452
  %v454 = vpop.xlane.xlu0 %453
  %v455 = vcvt.f32.s32 %v454
  %v456 = vcvt.f32.s32 %v450
  %v457 = vshll.u32 %v456, 16
  %v458 = vadd.s32 %v457, %v455
  %v459 = vsel %vm29, %v409, 2147483647
  %v460 = vand.u32 %v459, 65535
  %v461 = vshra.s32 %v459, 16
  %v462 = vcvt.s32.f32 %v460
  %v463 = vcvt.s32.f32 %v461
  %464 = vmin.xlane.f32.xlu0 %v463
  %v465 = vpop.xlane.xlu0 %464
  %vm466 = vcmp.eq.f32.partialorder %v463, %v465
  %v467 = vsel %vm466, %v462, inf
  %468 = vmin.xlane.f32.xlu0 %v467
  %v469 = vpop.xlane.xlu0 %468
  %v470 = vcvt.f32.s32 %v469
  %v471 = vcvt.f32.s32 %v465
  %v472 = vshll.u32 %v471, 16
  %v473 = vadd.s32 %v472, %v470
  %v474 = vsel %vm29, %v410, 2147483647
  %v475 = vand.u32 %v474, 65535
  %v476 = vshra.s32 %v474, 16
  %v477 = vcvt.s32.f32 %v475
  %v478 = vcvt.s32.f32 %v476
  %479 = vmin.xlane.f32.xlu0 %v478
  %v480 = vpop.xlane.xlu0 %479
  %vm481 = vcmp.eq.f32.partialorder %v478, %v480
  %v482 = vsel %vm481, %v477, inf
  %483 = vmin.xlane.f32.xlu0 %v482
  %v484 = vpop.xlane.xlu0 %483
  %v485 = vcvt.f32.s32 %v484
  %v486 = vcvt.f32.s32 %v480
  %v487 = vshll.u32 %v486, 16
  %v488 = vadd.s32 %v487, %v485
  %v489 = vsel %vm29, %v411, 2147483647
  %v490 = vand.u32 %v489, 65535
  %v491 = vshra.s32 %v489, 16
  %v492 = vcvt.s32.f32 %v490
  %v493 = vcvt.s32.f32 %v491
  %494 = vmin.xlane.f32.xlu0 %v493
  %v495 = vpop.xlane.xlu0 %494
  %vm496 = vcmp.eq.f32.partialorder %v493, %v495
  %v497 = vsel %vm496, %v492, inf
  %498 = vmin.xlane.f32.xlu0 %v497
  %v499 = vpop.xlane.xlu0 %498
  %v500 = vcvt.f32.s32 %v499
  %v501 = vcvt.f32.s32 %v495
  %v502 = vshll.u32 %v501, 16
  %v503 = vadd.s32 %v502, %v500
  %v504 = vsel %vm29, %v412, 2147483647
  %v505 = vand.u32 %v504, 65535
  %v506 = vshra.s32 %v504, 16
  %v507 = vcvt.s32.f32 %v505
  %v508 = vcvt.s32.f32 %v506
  %509 = vmin.xlane.f32.xlu0 %v508
  %v510 = vpop.xlane.xlu0 %509
  %vm511 = vcmp.eq.f32.partialorder %v508, %v510
  %v512 = vsel %vm511, %v507, inf
  %513 = vmin.xlane.f32.xlu0 %v512
  %v514 = vpop.xlane.xlu0 %513
  %v515 = vcvt.f32.s32 %v514
  %v516 = vcvt.f32.s32 %v510
  %v517 = vshll.u32 %v516, 16
  %v518 = vadd.s32 %v517, %v515
  %v519 = vsel %vm29, %v413, 2147483647
  %v520 = vand.u32 %v519, 65535
  %v521 = vshra.s32 %v519, 16
  %v522 = vcvt.s32.f32 %v520
  %v523 = vcvt.s32.f32 %v521
  %524 = vmin.xlane.f32.xlu0 %v523
  %v525 = vpop.xlane.xlu0 %524
  %vm526 = vcmp.eq.f32.partialorder %v523, %v525
  %v527 = vsel %vm526, %v522, inf
  %528 = vmin.xlane.f32.xlu0 %v527
  %v529 = vpop.xlane.xlu0 %528
  %v530 = vcvt.f32.s32 %v529
  %v531 = vcvt.f32.s32 %v525
  %v532 = vshll.u32 %v531, 16
  %v533 = vadd.s32 %v532, %v530
  %vm534 = vcmp.eq.f32.partialorder %v11, %v32
  %vm535 = vcmp.eq.f32.partialorder %v12, %v35
  %vm536 = vcmp.eq.f32.partialorder %v13, %v38
  %vm537 = vcmp.eq.f32.partialorder %v14, %v41
  %vm538 = vcmp.eq.f32.partialorder %v15, %v44
  %vm539 = vcmp.eq.f32.partialorder %v16, %v47
  %vm540 = vcmp.eq.f32.partialorder %v17, %v50
  %vm541 = vcmp.eq.f32.partialorder %v18, %v53
  %v542 = vsel %vm534, %v28, 32
  %v543 = vsel %vm535, %v28, 32
  %v544 = vsel %vm536, %v28, 32
  %v545 = vsel %vm537, %v28, 32
  %v546 = vsel %vm538, %v28, 32
  %v547 = vsel %vm539, %v28, 32
  %v548 = vsel %vm540, %v28, 32
  %v549 = vsel %vm541, %v28, 32
  %v550 = vsel %vm29, %v542, 2147483647
  %v551 = vand.u32 %v550, 65535
  %v552 = vshra.s32 %v550, 16
  %v553 = vcvt.s32.f32 %v551
  %v554 = vcvt.s32.f32 %v552
  %555 = vmin.xlane.f32.xlu0 %v554
  %v556 = vpop.xlane.xlu0 %555
  %vm557 = vcmp.eq.f32.partialorder %v554, %v556
  %v558 = vsel %vm557, %v553, inf
  %559 = vmin.xlane.f32.xlu0 %v558
  %v560 = vpop.xlane.xlu0 %559
  %v561 = vcvt.f32.s32 %v560
  %v562 = vcvt.f32.s32 %v556
  %v563 = vshll.u32 %v562, 16
  %v564 = vadd.s32 %v563, %v561
  %v565 = vsel %vm29, %v543, 2147483647
  %v566 = vand.u32 %v565, 65535
  %v567 = vshra.s32 %v565, 16
  %v568 = vcvt.s32.f32 %v566
  %v569 = vcvt.s32.f32 %v567
  %570 = vmin.xlane.f32.xlu0 %v569
  %v571 = vpop.xlane.xlu0 %570
  %vm572 = vcmp.eq.f32.partialorder %v569, %v571
  %v573 = vsel %vm572, %v568, inf
  %574 = vmin.xlane.f32.xlu0 %v573
  %v575 = vpop.xlane.xlu0 %574
  %v576 = vcvt.f32.s32 %v575
  %v577 = vcvt.f32.s32 %v571
  %v578 = vshll.u32 %v577, 16
  %v579 = vadd.s32 %v578, %v576
  %v580 = vsel %vm29, %v544, 2147483647
  %v581 = vand.u32 %v580, 65535
  %v582 = vshra.s32 %v580, 16
  %v583 = vcvt.s32.f32 %v581
  %v584 = vcvt.s32.f32 %v582
  %585 = vmin.xlane.f32.xlu0 %v584
  %v586 = vpop.xlane.xlu0 %585
  %vm587 = vcmp.eq.f32.partialorder %v584, %v586
  %v588 = vsel %vm587, %v583, inf
  %589 = vmin.xlane.f32.xlu0 %v588
  %v590 = vpop.xlane.xlu0 %589
  %v591 = vcvt.f32.s32 %v590
  %v592 = vcvt.f32.s32 %v586
  %v593 = vshll.u32 %v592, 16
  %v594 = vadd.s32 %v593, %v591
  %v595 = vsel %vm29, %v545, 2147483647
  %v596 = vand.u32 %v595, 65535
  %v597 = vshra.s32 %v595, 16
  %v598 = vcvt.s32.f32 %v596
  %v599 = vcvt.s32.f32 %v597
  %600 = vmin.xlane.f32.xlu0 %v599
  %v601 = vpop.xlane.xlu0 %600
  %vm602 = vcmp.eq.f32.partialorder %v599, %v601
  %v603 = vsel %vm602, %v598, inf
  %604 = vmin.xlane.f32.xlu0 %v603
  %v605 = vpop.xlane.xlu0 %604
  %v606 = vcvt.f32.s32 %v605
  %v607 = vcvt.f32.s32 %v601
  %v608 = vshll.u32 %v607, 16
  %v609 = vadd.s32 %v608, %v606
  %v610 = vsel %vm29, %v546, 2147483647
  %v611 = vand.u32 %v610, 65535
  %v612 = vshra.s32 %v610, 16
  %v613 = vcvt.s32.f32 %v611
  %v614 = vcvt.s32.f32 %v612
  %615 = vmin.xlane.f32.xlu0 %v614
  %v616 = vpop.xlane.xlu0 %615
  %vm617 = vcmp.eq.f32.partialorder %v614, %v616
  %v618 = vsel %vm617, %v613, inf
  %619 = vmin.xlane.f32.xlu0 %v618
  %v620 = vpop.xlane.xlu0 %619
  %v621 = vcvt.f32.s32 %v620
  %v622 = vcvt.f32.s32 %v616
  %v623 = vshll.u32 %v622, 16
  %v624 = vadd.s32 %v623, %v621
  %v625 = vsel %vm29, %v547, 2147483647
  %v626 = vand.u32 %v625, 65535
  %v627 = vshra.s32 %v625, 16
  %v628 = vcvt.s32.f32 %v626
  %v629 = vcvt.s32.f32 %v627
  %630 = vmin.xlane.f32.xlu0 %v629
  %v631 = vpop.xlane.xlu0 %630
  %vm632 = vcmp.eq.f32.partialorder %v629, %v631
  %v633 = vsel %vm632, %v628, inf
  %634 = vmin.xlane.f32.xlu0 %v633
  %v635 = vpop.xlane.xlu0 %634
  %v636 = vcvt.f32.s32 %v635
  %v637 = vcvt.f32.s32 %v631
  %v638 = vshll.u32 %v637, 16
  %v639 = vadd.s32 %v638, %v636
  %v640 = vsel %vm29, %v548, 2147483647
  %v641 = vand.u32 %v640, 65535
  %v642 = vshra.s32 %v640, 16
  %v643 = vcvt.s32.f32 %v641
  %v644 = vcvt.s32.f32 %v642
  %645 = vmin.xlane.f32.xlu0 %v644
  %v646 = vpop.xlane.xlu0 %645
  %vm647 = vcmp.eq.f32.partialorder %v644, %v646
  %v648 = vsel %vm647, %v643, inf
  %649 = vmin.xlane.f32.xlu0 %v648
  %v650 = vpop.xlane.xlu0 %649
  %v651 = vcvt.f32.s32 %v650
  %v652 = vcvt.f32.s32 %v646
  %v653 = vshll.u32 %v652, 16
  %v654 = vadd.s32 %v653, %v651
  %v655 = vsel %vm29, %v549, 2147483647
  %v656 = vand.u32 %v655, 65535
  %v657 = vshra.s32 %v655, 16
  %v658 = vcvt.s32.f32 %v656
  %v659 = vcvt.s32.f32 %v657
  %660 = vmin.xlane.f32.xlu0 %v659
  %v661 = vpop.xlane.xlu0 %660
  %vm662 = vcmp.eq.f32.partialorder %v659, %v661
  %v663 = vsel %vm662, %v658, inf
  %664 = vmin.xlane.f32.xlu0 %v663
  %v665 = vpop.xlane.xlu0 %664
  %v666 = vcvt.f32.s32 %v665
  %v667 = vcvt.f32.s32 %v661
  %v668 = vshll.u32 %v667, 16
  %v669 = vadd.s32 %v668, %v666
  %vm670 = vcmp.eq.s32.totalorder %v28, %v428
  %vm671 = vcmp.eq.s32.totalorder %v28, %v443
  %vm672 = vcmp.eq.s32.totalorder %v28, %v458
  %vm673 = vcmp.eq.s32.totalorder %v28, %v473
  %vm674 = vcmp.eq.s32.totalorder %v28, %v488
  %vm675 = vcmp.eq.s32.totalorder %v28, %v503
  %vm676 = vcmp.eq.s32.totalorder %v28, %v518
  %vm677 = vcmp.eq.s32.totalorder %v28, %v533
  %v678 = vsel %vm670, %v78, 0.0
  %v679 = vsel %vm671, %v79, 0.0
  %v680 = vsel %vm672, %v80, 0.0
  %v681 = vsel %vm673, %v81, 0.0
  %v682 = vsel %vm674, %v82, 0.0
  %v683 = vsel %vm675, %v83, 0.0
  %v684 = vsel %vm676, %v84, 0.0
  %v685 = vsel %vm677, %v85, 0.0
  %v686 = vsel %vm29, %v678, 0.0
  %687 = vadd.xlane.f32.xlu0 %v686
  %v688 = vpop.xlane.xlu0 %687
  %v689 = vsel %vm29, %v679, 0.0
  %690 = vadd.xlane.f32.xlu0 %v689
  %v691 = vpop.xlane.xlu0 %690
  %v692 = vsel %vm29, %v680, 0.0
  %693 = vadd.xlane.f32.xlu0 %v692
  %v694 = vpop.xlane.xlu0 %693
  %v695 = vsel %vm29, %v681, 0.0
  %696 = vadd.xlane.f32.xlu0 %v695
  %v697 = vpop.xlane.xlu0 %696
  %v698 = vsel %vm29, %v682, 0.0
  %699 = vadd.xlane.f32.xlu0 %v698
  %v700 = vpop.xlane.xlu0 %699
  %v701 = vsel %vm29, %v683, 0.0
  %702 = vadd.xlane.f32.xlu0 %v701
  %v703 = vpop.xlane.xlu0 %702
  %v704 = vsel %vm29, %v684, 0.0
  %705 = vadd.xlane.f32.xlu0 %v704
  %v706 = vpop.xlane.xlu0 %705
  %v707 = vsel %vm29, %v685, 0.0
  %708 = vadd.xlane.f32.xlu0 %v707
  %v709 = vpop.xlane.xlu0 %708
  %v710 = vsub.f32 %v688, %v255
  %v711 = vsub.f32 %v691, %v257
  %v712 = vsub.f32 %v694, %v259
  %v713 = vsub.f32 %v697, %v261
  %v714 = vsub.f32 %v700, %v263
  %v715 = vsub.f32 %v703, %v265
  %v716 = vsub.f32 %v706, %v267
  %v717 = vsub.f32 %v709, %v269
  %v718 = vrot.slane %v710, 4
  %v719 = vadd.f32 %v710, %v718
  %v720 = vrot.slane %v719, 2
  %v721 = vadd.f32 %v719, %v720
  %v722 = vrot.slane %v721, 1
  %v723 = vadd.f32 %v721, %v722
  %v724 = vrot.slane %v711, 4
  %v725 = vadd.f32 %v711, %v724
  %v726 = vrot.slane %v725, 2
  %v727 = vadd.f32 %v725, %v726
  %v728 = vrot.slane %v727, 1
  %v729 = vadd.f32 %v727, %v728
  %v730 = vrot.slane %v712, 4
  %v731 = vadd.f32 %v712, %v730
  %v732 = vrot.slane %v731, 2
  %v733 = vadd.f32 %v731, %v732
  %v734 = vrot.slane %v733, 1
  %v735 = vadd.f32 %v733, %v734
  %v736 = vrot.slane %v713, 4
  %v737 = vadd.f32 %v713, %v736
  %v738 = vrot.slane %v737, 2
  %v739 = vadd.f32 %v737, %v738
  %v740 = vrot.slane %v739, 1
  %v741 = vadd.f32 %v739, %v740
  %v742 = vrot.slane %v714, 4
  %v743 = vadd.f32 %v714, %v742
  %v744 = vrot.slane %v743, 2
  %v745 = vadd.f32 %v743, %v744
  %v746 = vrot.slane %v745, 1
  %v747 = vadd.f32 %v745, %v746
  %v748 = vrot.slane %v715, 4
  %v749 = vadd.f32 %v715, %v748
  %v750 = vrot.slane %v749, 2
  %v751 = vadd.f32 %v749, %v750
  %v752 = vrot.slane %v751, 1
  %v753 = vadd.f32 %v751, %v752
  %v754 = vrot.slane %v716, 4
  %v755 = vadd.f32 %v716, %v754
  %v756 = vrot.slane %v755, 2
  %v757 = vadd.f32 %v755, %v756
  %v758 = vrot.slane %v757, 1
  %v759 = vadd.f32 %v757, %v758
  %v760 = vrot.slane %v717, 4
  %v761 = vadd.f32 %v717, %v760
  %v762 = vrot.slane %v761, 2
  %v763 = vadd.f32 %v761, %v762
  %v764 = vrot.slane %v763, 1
  %v765 = vadd.f32 %v763, %v764
  %v766 = vsub.f32 0.0, %v723
  %v767 = vsub.f32 0.0, %v729
  %v768 = vsub.f32 0.0, %v735
  %v769 = vsub.f32 0.0, %v741
  %v770 = vsub.f32 0.0, %v747
  %v771 = vsub.f32 0.0, %v753
  %v772 = vsub.f32 0.0, %v759
  %v773 = vsub.f32 0.0, %v765
  %v774 = vmul.f32 %v766, 0.125
  %v775 = vmul.f32 %v767, 0.125
  %v776 = vmul.f32 %v768, 0.125
  %v777 = vmul.f32 %v769, 0.125
  %v778 = vmul.f32 %v770, 0.125
  %v779 = vmul.f32 %v771, 0.125
  %v780 = vmul.f32 %v772, 0.125
  %v781 = vmul.f32 %v773, 0.125
  %vm782 = vcmp.eq.s32.totalorder %v564, %v428
  %vm783 = vcmp.eq.s32.totalorder %v579, %v443
  %vm784 = vcmp.eq.s32.totalorder %v594, %v458
  %vm785 = vcmp.eq.s32.totalorder %v609, %v473
  %vm786 = vcmp.eq.s32.totalorder %v624, %v488
  %vm787 = vcmp.eq.s32.totalorder %v639, %v503
  %vm788 = vcmp.eq.s32.totalorder %v654, %v518
  %vm789 = vcmp.eq.s32.totalorder %v669, %v533
  %v790 = vsel %vm782, 1, 0
  %v791 = vsel %vm783, 1, 0
  %v792 = vsel %vm784, 1, 0
  %v793 = vsel %vm785, 1, 0
  %v794 = vsel %vm786, 1, 0
  %v795 = vsel %vm787, 1, 0
  %v796 = vsel %vm788, 1, 0
  %v797 = vsel %vm789, 1, 0
  %v798 = vcvt.s32.f32 %v790
  %v799 = vcvt.s32.f32 %v791
  %v800 = vcvt.s32.f32 %v792
  %v801 = vcvt.s32.f32 %v793
  %v802 = vcvt.s32.f32 %v794
  %v803 = vcvt.s32.f32 %v795
  %v804 = vcvt.s32.f32 %v796
  %v805 = vcvt.s32.f32 %v797
  %v806 = vlaneseq
  %v807 = vshrl.u32 %v806, 7
  %v808 = vadd.s32 %v807, 2
  %vm809 = vcmp.eq.s32.totalorder %v28, %v808
  %v810 = vsel %vm809, 1, 0
  %v811 = vcvt.s32.f32 %v810
  %v812 = vmul.f32 %v811, %v798
  %v813 = vmul.f32 %v811, %v799
  %v814 = vmul.f32 %v811, %v800
  %v815 = vmul.f32 %v811, %v801
  %v816 = vmul.f32 %v811, %v802
  %v817 = vmul.f32 %v811, %v803
  %v818 = vmul.f32 %v811, %v804
  %v819 = vmul.f32 %v811, %v805
  %v820 = vrot.slane %v812, 4
  %v821 = vadd.f32 %v812, %v820
  %v822 = vrot.slane %v821, 2
  %v823 = vadd.f32 %v821, %v822
  %v824 = vrot.slane %v823, 1
  %v825 = vadd.f32 %v823, %v824
  %v826 = vrot.slane %v813, 4
  %v827 = vadd.f32 %v813, %v826
  %v828 = vrot.slane %v827, 2
  %v829 = vadd.f32 %v827, %v828
  %v830 = vrot.slane %v829, 1
  %v831 = vadd.f32 %v829, %v830
  %v832 = vrot.slane %v814, 4
  %v833 = vadd.f32 %v814, %v832
  %v834 = vrot.slane %v833, 2
  %v835 = vadd.f32 %v833, %v834
  %v836 = vrot.slane %v835, 1
  %v837 = vadd.f32 %v835, %v836
  %v838 = vrot.slane %v815, 4
  %v839 = vadd.f32 %v815, %v838
  %v840 = vrot.slane %v839, 2
  %v841 = vadd.f32 %v839, %v840
  %v842 = vrot.slane %v841, 1
  %v843 = vadd.f32 %v841, %v842
  %v844 = vrot.slane %v816, 4
  %v845 = vadd.f32 %v816, %v844
  %v846 = vrot.slane %v845, 2
  %v847 = vadd.f32 %v845, %v846
  %v848 = vrot.slane %v847, 1
  %v849 = vadd.f32 %v847, %v848
  %v850 = vrot.slane %v817, 4
  %v851 = vadd.f32 %v817, %v850
  %v852 = vrot.slane %v851, 2
  %v853 = vadd.f32 %v851, %v852
  %v854 = vrot.slane %v853, 1
  %v855 = vadd.f32 %v853, %v854
  %v856 = vrot.slane %v818, 4
  %v857 = vadd.f32 %v818, %v856
  %v858 = vrot.slane %v857, 2
  %v859 = vadd.f32 %v857, %v858
  %v860 = vrot.slane %v859, 1
  %v861 = vadd.f32 %v859, %v860
  %v862 = vrot.slane %v819, 4
  %v863 = vadd.f32 %v819, %v862
  %v864 = vrot.slane %v863, 2
  %v865 = vadd.f32 %v863, %v864
  %v866 = vrot.slane %v865, 1
  %v867 = vadd.f32 %v865, %v866
  %vm868 = vcmp.eq.s32.totalorder %v28, 0
  %vm877 = vcmask 1041409
  %v878 = vsel %vm877, %v391, %v390
  %vm879 = vcmask 1042434
  %v880 = vsel %vm879, %v392, %v878
  %vm881 = vcmask 1043459
  %v882 = vsel %vm881, %v393, %v880
  %vm883 = vcmask 1044484
  %v884 = vsel %vm883, %v394, %v882
  %vm885 = vcmask 1045509
  %v886 = vsel %vm885, %v395, %v884
  %vm887 = vcmask 1046534
  %v888 = vsel %vm887, %v396, %v886
  %vm889 = vcmask 1047559
  %v890 = vsel %vm889, %v397, %v888
  %v900 = vsel %vm877, %v831, %v825
  %v901 = vsel %vm879, %v837, %v900
  %v902 = vsel %vm881, %v843, %v901
  %v903 = vsel %vm883, %v849, %v902
  %v904 = vsel %vm885, %v855, %v903
  %v905 = vsel %vm887, %v861, %v904
  %v906 = vsel %vm889, %v867, %v905
  %v908 = vsel %vm868, %v890, %v906
  %vm909 = vcmp.eq.s32.totalorder %v28, 1
  %v918 = vsel %vm877, %v775, %v774
  %v919 = vsel %vm879, %v776, %v918
  %v920 = vsel %vm881, %v777, %v919
  %v921 = vsel %vm883, %v778, %v920
  %v922 = vsel %vm885, %v779, %v921
  %v923 = vsel %vm887, %v780, %v922
  %v924 = vsel %vm889, %v781, %v923
  %v926 = vsel %vm909, %v924, %v908
  %927 = vst [vmem:[%s2] sm:$0xff] %v926
  // Predicated region
  $region10: #{inner_loss_pallas.1} parent=0 // pred_check
    _
  $region11: #{inner_loss_pallas.1} parent=0 // pred_check_branch
    %929 = sbr.rel (0) target = $region13
  $region12: #{inner_loss_pallas.1} parent=0 // pred_region
    _
  $region13: #{inner_loss_pallas.1} parent=0 // pred_fallthru
    _
  // Predicated region
  $region14: #{inner_loss_pallas.1} parent=0 // pred_check
    _
  $region15: #{inner_loss_pallas.1} parent=0 // pred_check_branch
    %931 = sbr.rel (0) target = $region17
  $region16: #{inner_loss_pallas.1} parent=0 // pred_region
    _
  $region17: #{inner_loss_pallas.1} parent=0 // pred_fallthru
    _

</llo_original>
